<compile_context>
chip_gen: v7x
topology: tpu7x:2x2x1
jax: 0.10.0
libtpu: 0.0.40
codegen_flags: <defaults>
</compile_context>

<pallas_src>
import jax
import jax.numpy as jnp
from jax.experimental import pallas as pl
from jax.experimental.pallas import tpu as pltpu


def _attention_kernel(x_ref, wqkv_ref, wo_ref, bqkv_ref, bo_ref, o_ref):
    Bt, N, C = x_ref.shape

    # Fold the batch block into one (Bt*N, C) slab (large MXU M-dim) and cast
    # to bf16 in-kernel (VPU work hidden under MXU slack).
    x = x_ref[...].reshape(Bt * N, C).astype(jnp.bfloat16)

    # Fused q/k/v projection: one (Bt*N, C) x (C, 3C) matmul, f32 accumulation.
    # 1/sqrt(head_dim) is pre-folded into the q slice of wqkv/bqkv.
    qkv = jnp.dot(x, wqkv_ref[...],
                  preferred_element_type=jnp.float32) + bqkv_ref[...]

    # Lane-aligned (multiple-of-128) static slices of the fused projection.
    qb = qkv[:, 0 * C:1 * C].reshape(Bt, N, C).astype(jnp.bfloat16)
    kb = qkv[:, 1 * C:2 * C].reshape(Bt, N, C).astype(jnp.bfloat16)
    vb = qkv[:, 2 * C:3 * C].reshape(Bt, N, C).astype(jnp.bfloat16)

    # Attention logits: contract the C axes directly (no explicit k transpose,
    # so no XLU traffic).  (Bt, N, N) f32.
    logits = jax.lax.dot_general(
        qb, kb,
        dimension_numbers=(((2,), (2,)), ((0,), (0,))),
        preferred_element_type=jnp.float32)

    # Numerically stable softmax in f32; normalization deferred past the PV
    # matmul so the elementwise scale touches (N, C) instead of (N, N).
    m = jnp.max(logits, axis=-1, keepdims=True)
    e = jnp.exp(logits - m)
    denom = jnp.sum(e, axis=-1, keepdims=True)

    out = jax.lax.dot_general(
        e.astype(jnp.bfloat16), vb,
        dimension_numbers=(((2,), (1,)), ((0,), (0,))),
        preferred_element_type=jnp.float32)          # (Bt, N, C) f32
    out = out * pl.reciprocal(denom, approx=True)

    # Output projection.
    y = jnp.dot(out.reshape(Bt * N, C).astype(jnp.bfloat16), wo_ref[...],
                preferred_element_type=jnp.float32) + bo_ref[...]

    o_ref[...] = y.reshape(Bt, N, C).astype(o_ref.dtype)


def _vmem_limit_bytes():
    """Chip-aware VMEM limit with ~20% headroom for Mosaic internal scratch."""
    try:
        cap = int(pltpu.get_tpu_info().vmem_capacity_bytes)
    except Exception:
        cap = 64 * 1024 * 1024      # conservative (v7x-sized) fallback
    return int(cap * 0.8)


def _vmem_bytes_estimate(Bt, N, C, x_itemsize, out_itemsize):
    """Rough per-grid-step VMEM working set for a batch tile of Bt."""
    rows = Bt * N
    io = 2 * rows * C * x_itemsize + 2 * rows * C * out_itemsize  # dbl-buffered
    weights = (3 * C * C + C * C) * 2 + (3 * C + C) * 4           # bf16 W, f32 b
    inter = (rows * C * 2            # x bf16
             + rows * 3 * C * 4      # fused qkv f32
             + rows * 3 * C * 2      # q/k/v bf16 copies
             + 2 * Bt * N * N * 4    # logits + exp f32
             + Bt * N * N * 2        # exp bf16
             + rows * C * 4          # PV accumulator f32
             + rows * C * 4)         # out-proj accumulator f32
    return io + weights + inter


def _choose_batch_tile(B, N, C, x_itemsize, out_itemsize, vmem_budget):
    """Batch tile: big flattened M for the MXU, VMEM-bounded, >=2 grid steps."""
    target_rows = 1024
    Bt = max(1, min(B, target_rows // max(N, 1)))
    if B >= 2:
        Bt = min(Bt, pl.cdiv(B, 2))   # >= 2 grid steps -> both v7x TCs get work
    while Bt > 1 and _vmem_bytes_estimate(Bt, N, C, x_itemsize,
                                          out_itemsize) > vmem_budget:
        Bt -= 1
    return Bt


def prepare_params(params):
    """One-time parameter prep.

    * torch Linear stores (out, in); transpose to (in, out) for x @ W layout.
    * Fold 1/sqrt(head_dim) into wq/bq in f32 (then cast) — equivalent to
      scaling the logits.
    * Fuse q/k/v weights into (C, 3C) bf16 and biases into (1, 3C) f32.
    """
    C = params["wq"].shape[0]
    scale = 1.0 / (C ** 0.5)          # num_heads == 1 -> head_dim == C
    wq = jnp.asarray(params["wq"], jnp.float32) * scale
    bq = jnp.asarray(params["bq"], jnp.float32) * scale
    wk = jnp.asarray(params["wk"], jnp.float32)
    bk = jnp.asarray(params["bk"], jnp.float32)
    wv = jnp.asarray(params["wv"], jnp.float32)
    bv = jnp.asarray(params["bv"], jnp.float32)
    wo = jnp.asarray(params["wo"], jnp.float32)
    bo = jnp.asarray(params["bo"], jnp.float32)

    wqkv = jnp.concatenate([wq.T, wk.T, wv.T], axis=1).astype(jnp.bfloat16)
    bqkv = jnp.concatenate([bq, bk, bv]).reshape(1, 3 * C).astype(jnp.float32)
    return {
        "wqkv": wqkv,                                  # (C, 3C) bf16
        "bqkv": bqkv,                                  # (1, 3C) f32
        "wo": wo.T.astype(jnp.bfloat16),               # (C, C) bf16
        "bo": bo.reshape(1, C).astype(jnp.float32),    # (1, C) f32
    }


def image_part_attention(x, prep, *, out_dtype=jnp.bfloat16):
    """x: (B, N, C) float32 (kept in native dtype). prep: prepare_params(...)."""
    B, N, C = x.shape
    out_itemsize = jnp.dtype(out_dtype).itemsize
    vmem_limit = _vmem_limit_bytes()
    Bt = _choose_batch_tile(B, N, C, x.dtype.itemsize, out_itemsize, vmem_limit)
    grid = (pl.cdiv(B, Bt),)

    # Weights / biases: fully resident in VMEM, no per-step blocking/DMA.
    vmem_full = pl.BlockSpec(memory_space=pltpu.MemorySpace.VMEM)

    flops = B * (8 * N * C * C + 4 * N * N * C)
    bytes_accessed = (B * N * C * x.dtype.itemsize     # x in (f32)
                      + B * N * C * out_itemsize       # output (bf16)
                      + 4 * C * C * 2                  # weights (bf16)
                      + 4 * C * 4)                     # biases (f32)
    cost = pl.CostEstimate(flops=flops,
                           transcendentals=B * N * N,
                           bytes_accessed=bytes_accessed)

    return pl.pallas_call(
        _attention_kernel,
        out_shape=jax.ShapeDtypeStruct((B, N, C), out_dtype),
        grid_spec=pltpu.PrefetchScalarGridSpec(
            num_scalar_prefetch=0,
            grid=grid,
            in_specs=[
                pl.BlockSpec((Bt, N, C), lambda b: (b, 0, 0)),   # x (f32)
                vmem_full, vmem_full,                            # wqkv, wo
                vmem_full, vmem_full,                            # bqkv, bo
            ],
            out_specs=pl.BlockSpec((Bt, N, C), lambda b: (b, 0, 0)),
        ),
        compiler_params=pltpu.CompilerParams(
            dimension_semantics=("parallel",),
            vmem_limit_bytes=vmem_limit),
        cost_estimate=cost,
    )(x, prep["wqkv"], prep["wo"], prep["bqkv"], prep["bo"])


def _reference(x, params):
    """Pure-JAX f32 reference mirroring the PyTorch forward."""
    def linear(h, w, b):
        return h @ w.T + b
    q = linear(x, params["wq"], params["bq"])
    k = linear(x, params["wk"], params["bk"])
    v = linear(x, params["wv"], params["bv"])
    C = x.shape[-1]
    scale = 1.0 / (C ** 0.5)
    logits = jnp.einsum("bnc,bmc->bnm", q, k) * scale
    attn = jax.nn.softmax(logits, axis=-1)
    out = jnp.einsum("bnm,bmc->bnc", attn, v)
    return linear(out, params["wo"], params["bo"])


if __name__ == "__main__":
    # Small shapes consistent with the module: N=16 image parts, lane-dense
    # C=128 embed dim, batch 2.  With B=2 the grid has 2 "parallel" steps.
    B, N, C = 2, 16, 128

    key = jax.random.PRNGKey(0)
    keys = jax.random.split(key, 9)
    x = jax.random.normal(keys[0], (B, N, C), dtype=jnp.float32)

    def init_w(k):
        return jax.random.normal(k, (C, C), dtype=jnp.float32) * 0.05

    def init_b(k):
        return jax.random.normal(k, (C,), dtype=jnp.float32) * 0.05

    params = {
        "wq": init_w(keys[1]), "bq": init_b(keys[2]),
        "wk": init_w(keys[3]), "bk": init_b(keys[4]),
        "wv": init_w(keys[5]), "bv": init_b(keys[6]),
        "wo": init_w(keys[7]), "bo": init_b(keys[8]),
    }

    prep = prepare_params(params)          # one-time fuse/transpose/bf16 cast
    out = image_part_attention(x, prep)
    out = jax.block_until_ready(out)

    ref = _reference(x, params)
    assert out.shape == (B, N, C)
    assert out.dtype == jnp.bfloat16
    # bf16 MXU inputs + bf16 output + approx reciprocal -> wider tolerance.
    assert jnp.allclose(out.astype(jnp.float32), ref, atol=3e-2, rtol=3e-2), \
        "mismatch vs reference"

    print("KERNEL_OK")
</pallas_src>

<mosaic_0001>
module attributes {stable_mosaic.version = 11 : i64} {
  func.func @_attention_kernel(%arg0: i32, %arg1: memref<1x16x128xf32, #tpu.memory_space<vmem>>, %arg2: memref<128x384xbf16, #tpu.memory_space<vmem>>, %arg3: memref<128x128xbf16, #tpu.memory_space<vmem>>, %arg4: memref<1x384xf32, #tpu.memory_space<vmem>>, %arg5: memref<1x128xf32, #tpu.memory_space<vmem>>, %arg6: memref<1x16x128xbf16, #tpu.memory_space<vmem>>) attributes {dimension_semantics = [#tpu.dimension_semantics<parallel>], iteration_bounds = array<i64: 2>, scalar_prefetch = 0 : i64, scratch_operands = 0 : i64, tpu.core_type = #tpu.core_type<tc>, window_params = [{transform_indices = @transform_0, window_bounds = array<i64: 1, 16, 128>}, {pipeline_mode = #tpu.pipeline_mode<synchronous>, transform_indices = @transform_1, window_bounds = array<i64: 128, 384>}, {pipeline_mode = #tpu.pipeline_mode<synchronous>, transform_indices = @transform_2, window_bounds = array<i64: 128, 128>}, {pipeline_mode = #tpu.pipeline_mode<synchronous>, transform_indices = @transform_3, window_bounds = array<i64: 1, 384>}, {pipeline_mode = #tpu.pipeline_mode<synchronous>, transform_indices = @transform_4, window_bounds = array<i64: 1, 128>}, {transform_indices = @transform_5, window_bounds = array<i64: 1, 16, 128>}]} {
    %c0 = arith.constant 0 : index
    %c0_0 = arith.constant 0 : index
    %c0_1 = arith.constant 0 : index
    %0 = vector.load %arg1[%c0, %c0_0, %c0_1] : memref<1x16x128xf32, #tpu.memory_space<vmem>>, vector<1x16x128xf32>
    %1 = vector.shape_cast %0 : vector<1x16x128xf32> to vector<16x128xf32>
    %2 = arith.truncf %1 : vector<16x128xf32> to vector<16x128xbf16>
    %c0_2 = arith.constant 0 : index
    %c0_3 = arith.constant 0 : index
    %3 = vector.load %arg2[%c0_2, %c0_3] : memref<128x384xbf16, #tpu.memory_space<vmem>>, vector<128x384xbf16>
    %cst = arith.constant dense<0.000000e+00> : vector<16x384xf32>
    %4 = tpu.matmul %2, %3, %cst {dimension_numbers = #tpu.dot_dimension_numbers<[1], [0], [0], [1], [0, 0, 1, 1], [], []>} : vector<16x128xbf16>, vector<128x384xbf16>, vector<16x384xf32> -> vector<16x384xf32>
    %c0_4 = arith.constant 0 : index
    %c0_5 = arith.constant 0 : index
    %5 = vector.load %arg4[%c0_4, %c0_5] : memref<1x384xf32, #tpu.memory_space<vmem>>, vector<1x384xf32>
    %6 = vector.broadcast %5 : vector<1x384xf32> to vector<16x384xf32>
    %7 = arith.addf %4, %6 : vector<16x384xf32>
    %8 = vector.extract_strided_slice %7 {offsets = [0, 0], sizes = [16, 128], strides = [1, 1]} : vector<16x384xf32> to vector<16x128xf32>
    %9 = vector.shape_cast %8 : vector<16x128xf32> to vector<1x16x128xf32>
    %10 = arith.truncf %9 : vector<1x16x128xf32> to vector<1x16x128xbf16>
    %11 = vector.extract_strided_slice %7 {offsets = [0, 128], sizes = [16, 128], strides = [1, 1]} : vector<16x384xf32> to vector<16x128xf32>
    %12 = vector.shape_cast %11 : vector<16x128xf32> to vector<1x16x128xf32>
    %13 = arith.truncf %12 : vector<1x16x128xf32> to vector<1x16x128xbf16>
    %14 = vector.extract_strided_slice %7 {offsets = [0, 256], sizes = [16, 128], strides = [1, 1]} : vector<16x384xf32> to vector<16x128xf32>
    %15 = vector.shape_cast %14 : vector<16x128xf32> to vector<1x16x128xf32>
    %16 = arith.truncf %15 : vector<1x16x128xf32> to vector<1x16x128xbf16>
    %cst_6 = arith.constant dense<0.000000e+00> : vector<1x16x16xf32>
    %17 = tpu.matmul %10, %13, %cst_6 {dimension_numbers = #tpu.dot_dimension_numbers<[2], [2], [1], [1], [0, 0, 0, 1, 1, 1], [0], [0]>} : vector<1x16x128xbf16>, vector<1x16x128xbf16>, vector<1x16x16xf32> -> vector<1x16x16xf32>
    %cst_7 = arith.constant dense<0xFF800000> : vector<1x16xf32>
    %18 = vector.multi_reduction <maximumf>, %17, %cst_7 [2] : vector<1x16x16xf32> to vector<1x16xf32>
    %19 = vector.shape_cast %18 : vector<1x16xf32> to vector<1x16x1xf32>
    %20 = vector.broadcast %19 : vector<1x16x1xf32> to vector<1x16x16xf32>
    %21 = arith.subf %17, %20 : vector<1x16x16xf32>
    %22 = math.exp %21 : vector<1x16x16xf32>
    %cst_8 = arith.constant dense<0.000000e+00> : vector<1x16xf32>
    %23 = vector.multi_reduction <add>, %22, %cst_8 [2] : vector<1x16x16xf32> to vector<1x16xf32>
    %24 = vector.shape_cast %23 : vector<1x16xf32> to vector<1x16x1xf32>
    %25 = arith.truncf %22 : vector<1x16x16xf32> to vector<1x16x16xbf16>
    %cst_9 = arith.constant dense<0.000000e+00> : vector<1x16x128xf32>
    %26 = tpu.matmul %25, %16, %cst_9 {dimension_numbers = #tpu.dot_dimension_numbers<[2], [1], [1], [2], [0, 0, 0, 1, 1, 2], [0], [0]>} : vector<1x16x16xbf16>, vector<1x16x128xbf16>, vector<1x16x128xf32> -> vector<1x16x128xf32>
    %27 = tpu.reciprocal %24 {approx = true} : vector<1x16x1xf32> -> vector<1x16x1xf32>
    %28 = vector.broadcast %27 : vector<1x16x1xf32> to vector<1x16x128xf32>
    %29 = arith.mulf %26, %28 : vector<1x16x128xf32>
    %30 = vector.shape_cast %29 : vector<1x16x128xf32> to vector<16x128xf32>
    %31 = arith.truncf %30 : vector<16x128xf32> to vector<16x128xbf16>
    %c0_10 = arith.constant 0 : index
    %c0_11 = arith.constant 0 : index
    %32 = vector.load %arg3[%c0_10, %c0_11] : memref<128x128xbf16, #tpu.memory_space<vmem>>, vector<128x128xbf16>
    %cst_12 = arith.constant dense<0.000000e+00> : vector<16x128xf32>
    %33 = tpu.matmul %31, %32, %cst_12 {dimension_numbers = #tpu.dot_dimension_numbers<[1], [0], [0], [1], [0, 0, 1, 1], [], []>} : vector<16x128xbf16>, vector<128x128xbf16>, vector<16x128xf32> -> vector<16x128xf32>
    %c0_13 = arith.constant 0 : index
    %c0_14 = arith.constant 0 : index
    %34 = vector.load %arg5[%c0_13, %c0_14] : memref<1x128xf32, #tpu.memory_space<vmem>>, vector<1x128xf32>
    %35 = vector.broadcast %34 : vector<1x128xf32> to vector<16x128xf32>
    %36 = arith.addf %33, %35 : vector<16x128xf32>
    %37 = vector.shape_cast %36 : vector<16x128xf32> to vector<1x16x128xf32>
    %38 = arith.truncf %37 : vector<1x16x128xf32> to vector<1x16x128xbf16>
    %c0_15 = arith.constant 0 : index
    %c0_16 = arith.constant 0 : index
    %c0_17 = arith.constant 0 : index
    %39 = vector.load %arg6[%c0_15, %c0_16, %c0_17] : memref<1x16x128xbf16, #tpu.memory_space<vmem>>, vector<1x16x128xbf16>
    tpu.vector_store %arg6[%c0_15, %c0_16, %c0_17], %38 {strides = array<i32>} : memref<1x16x128xbf16, #tpu.memory_space<vmem>>, vector<1x16x128xbf16>,
    return
  }
  func.func @transform_0(%arg0: i32) -> (i32, i32, i32) {
    %c0_i32 = arith.constant 0 : i32
    %c0_i32_0 = arith.constant 0 : i32
    %c0_i32_1 = arith.constant 0 : i32
    return %arg0, %c0_i32, %c0_i32_0 : i32, i32, i32
  }
  func.func @transform_1(%arg0: i32) -> (i32, i32) {
    %c0_i32 = arith.constant 0 : i32
    %c0_i32_0 = arith.constant 0 : i32
    %c0_i32_1 = arith.constant 0 : i32
    return %c0_i32, %c0_i32_0 : i32, i32
  }
  func.func @transform_2(%arg0: i32) -> (i32, i32) {
    %c0_i32 = arith.constant 0 : i32
    %c0_i32_0 = arith.constant 0 : i32
    %c0_i32_1 = arith.constant 0 : i32
    return %c0_i32, %c0_i32_0 : i32, i32
  }
  func.func @transform_3(%arg0: i32) -> (i32, i32) {
    %c0_i32 = arith.constant 0 : i32
    %c0_i32_0 = arith.constant 0 : i32
    %c0_i32_1 = arith.constant 0 : i32
    return %c0_i32, %c0_i32_0 : i32, i32
  }
  func.func @transform_4(%arg0: i32) -> (i32, i32) {
    %c0_i32 = arith.constant 0 : i32
    %c0_i32_0 = arith.constant 0 : i32
    %c0_i32_1 = arith.constant 0 : i32
    return %c0_i32, %c0_i32_0 : i32, i32
  }
  func.func @transform_5(%arg0: i32) -> (i32, i32, i32) {
    %c0_i32 = arith.constant 0 : i32
    %c0_i32_0 = arith.constant 0 : i32
    %c0_i32_1 = arith.constant 0 : i32
    return %arg0, %c0_i32, %c0_i32_0 : i32, i32, i32
  }
}

</mosaic_0001>

<llo_original>
// kernel: tpu_custom_call.1
$region0: #{tpu_custom_call.1}
  #allocation0 [shape = 'u32[]', space=smem, size = 0x4, offset = 0x4, fixed_abs, tag = 'smem constant byte address 0x4 - core index']
  #allocation1 [shape = 'u32[144,128]{1,0:T(1,128)}', space=vmem, size = 0x12000, scoped, tag = 'internal scratch']
  %s0 = inlined_call_operand.hbm [shape: f32[2,16,128], index: 0, kind: input, shape index: {}]
  %s1 = inlined_call_operand.hbm [shape: bf16[128,384], index: 1, kind: input, shape index: {}]
  %s2 = inlined_call_operand.hbm [shape: bf16[128,128], index: 2, kind: input, shape index: {}]
  %s3 = inlined_call_operand.vmem [shape: f32[1,384], index: 3, kind: input, shape index: {}]
  %s4 = inlined_call_operand.vmem [shape: f32[1,128], index: 4, kind: input, shape index: {}]
  %s5 = inlined_call_operand.hbm [shape: bf16[2,16,128], index: 5, kind: output, shape index: {}]
  %s6 = sld [smem:[#allocation0]]
  $region65: #{tpu_custom_call.1} parent=0
    _
  %s8 = ssub.s32 1, %s6
  %s9 = scalar_select 0, %s8, %s6
  $region1: #{tpu_custom_call.1} parent=0
    #allocation2 [shape = 'u8[16384]{0}', space=vmem, size = 0x4000, scoped, tag = 'input window, operand 0']
    #allocation3 [shape = 's32[2]{0}', space=sflag, size = 0x8, scoped, tag = 'scoped memory for tpu_custom_call.1']
    #allocation4 [shape = 's32[2]{0}', space=sflag, size = 0x8, scoped, tag = 'scoped memory for tpu_custom_call.1']
    #allocation5 [shape = 'u8[98304]{0}', space=vmem, size = 0x18000, scoped, tag = 'input window, operand 1, single buffered']
    #allocation6 [shape = 's32[1]{0}', space=sflag, size = 0x4, scoped, tag = 'scoped memory for tpu_custom_call.1']
    #allocation7 [shape = 'u8[32768]{0}', space=vmem, size = 0x8000, scoped, tag = 'input window, operand 2, single buffered']
    #allocation8 [shape = 'u8[8192]{0}', space=vmem, size = 0x2000, scoped, tag = 'output window, operand 0']
    %10 = vsyncpa [#allocation3], 0
    %s11 = scalar_lea.sflag [#allocation3], 1
    %12 = vsyncpa %s11, 0
    %13 = vsyncpa [#allocation6], 0
    %14 = vsyncpa [#allocation4], 0
    %s15 = scalar_lea.sflag [#allocation4], 1
    %16 = vsyncpa %s15, 0
    loop: start=0, step=1, limit=4
    $region2: #{tpu_custom_call.1} parent=1 // loop_pre_header
      _
    $region3: #{tpu_custom_call.1} parent=1 // loop_header
      %s18 = sphi 0, %s22
      %p19 = scmp.ge.s32.totalorder %s18, 4
      %s28 = sphi 0, %s30
      %s31 = sphi 0, %s28
      %s32 = sphi 0, %s31
      %s48 = sphi 0, %s32
      %s52 = sphi 0, %s52
      %s54 = sphi 0, %s52
      %s55 = sphi 0, %s54
      %s69 = sphi 0, %s55
      %s73 = sphi 0, %s73
      %s75 = sphi 0, %s73
      %s76 = sphi 0, %s75
      %s90 = sphi 0, %s76
      %s94 = sphi 0, %s94
      %s96 = sphi 0, %s94
      %s97 = sphi 0, %s96
      %s111 = sphi 0, %s97
      %s115 = sphi 0, %s115
      %s117 = sphi 0, %s115
      %s118 = sphi 0, %s117
      %s132 = sphi 0, %s118
      %s138 = sphi 0, %s140
      %s141 = sphi 0, %s138
      %s142 = sphi 0, %s141
      %s158 = sphi 0, %s142
    $region4: #{tpu_custom_call.1} parent=1 // loop_header_branch
      %21 = sbr.rel (%p19) target = $region8
    $region5: #{tpu_custom_call.1} parent=1 // loop_body
      %s23 = ssub.s32 %s18, 1
      %s24 = ssub.s32 %s18, 2
      %s25 = sadd.s32 %s18, 1
      %s26 = ssub.s32 %s18, %s25
      %p27 = scmp.eq.s32.totalorder %s26, 0
      %s29 = sadd.s32 %s28, 1
      %s30 = scalar_select %p27, %s28, %s29
      %p33 = pneg %p27
      %p34 = scmp.eq.s32.totalorder %s18, 1
      %p35 = por %p33, %p34
      %p36 = scmp.ne.s32.totalorder %s28, %s31
      %p37 = scmp.eq.s32.totalorder %s18, 0
      %p38 = por %p36, %p37
      %p39 = scmp.ne.s32.totalorder %s28, %s31
      %p40 = scmp.eq.s32.totalorder %s23, 1
      %p41 = por %p39, %p40
      %p42 = scmp.ne.s32.totalorder %s31, %s32
      %p43 = scmp.eq.s32.totalorder %s23, 0
      %p44 = por %p42, %p43
      %p45 = scmp.ne.s32.totalorder %s31, %s32
      %p46 = scmp.eq.s32.totalorder %s24, 1
      %p47 = por %p45, %p46
      %p49 = scmp.ne.s32.totalorder %s32, %s48
      %p50 = scmp.eq.s32.totalorder %s24, 0
      %p51 = por %p49, %p50
      %s53 = sadd.s32 %s52, 1
      %p56 = scmp.eq.s32.totalorder %s18, 1
      %p57 = scmp.ne.s32.totalorder %s52, %s54
      %p58 = scmp.eq.s32.totalorder %s18, 0
      %p59 = por %p57, %p58
      %p60 = scmp.ne.s32.totalorder %s52, %s54
      %p61 = scmp.eq.s32.totalorder %s23, 1
      %p62 = por %p60, %p61
      %p63 = scmp.ne.s32.totalorder %s54, %s55
      %p64 = scmp.eq.s32.totalorder %s23, 0
      %p65 = por %p63, %p64
      %p66 = scmp.ne.s32.totalorder %s54, %s55
      %p67 = scmp.eq.s32.totalorder %s24, 1
      %p68 = por %p66, %p67
      %p70 = scmp.ne.s32.totalorder %s55, %s69
      %p71 = scmp.eq.s32.totalorder %s24, 0
      %p72 = por %p70, %p71
      %s74 = sadd.s32 %s73, 1
      %p77 = scmp.eq.s32.totalorder %s18, 1
      %p78 = scmp.ne.s32.totalorder %s73, %s75
      %p79 = scmp.eq.s32.totalorder %s18, 0
      %p80 = por %p78, %p79
      %p81 = scmp.ne.s32.totalorder %s73, %s75
      %p82 = scmp.eq.s32.totalorder %s23, 1
      %p83 = por %p81, %p82
      %p84 = scmp.ne.s32.totalorder %s75, %s76
      %p85 = scmp.eq.s32.totalorder %s23, 0
      %p86 = por %p84, %p85
      %p87 = scmp.ne.s32.totalorder %s75, %s76
      %p88 = scmp.eq.s32.totalorder %s24, 1
      %p89 = por %p87, %p88
      %p91 = scmp.ne.s32.totalorder %s76, %s90
      %p92 = scmp.eq.s32.totalorder %s24, 0
      %p93 = por %p91, %p92
      %s95 = sadd.s32 %s94, 1
      %p98 = scmp.eq.s32.totalorder %s18, 1
      %p99 = scmp.ne.s32.totalorder %s94, %s96
      %p100 = scmp.eq.s32.totalorder %s18, 0
      %p101 = por %p99, %p100
      %p102 = scmp.ne.s32.totalorder %s94, %s96
      %p103 = scmp.eq.s32.totalorder %s23, 1
      %p104 = por %p102, %p103
      %p105 = scmp.ne.s32.totalorder %s96, %s97
      %p106 = scmp.eq.s32.totalorder %s23, 0
      %p107 = por %p105, %p106
      %p108 = scmp.ne.s32.totalorder %s96, %s97
      %p109 = scmp.eq.s32.totalorder %s24, 1
      %p110 = por %p108, %p109
      %p112 = scmp.ne.s32.totalorder %s97, %s111
      %p113 = scmp.eq.s32.totalorder %s24, 0
      %p114 = por %p112, %p113
      %s116 = sadd.s32 %s115, 1
      %p119 = scmp.eq.s32.totalorder %s18, 1
      %p120 = scmp.ne.s32.totalorder %s115, %s117
      %p121 = scmp.eq.s32.totalorder %s18, 0
      %p122 = por %p120, %p121
      %p123 = scmp.ne.s32.totalorder %s115, %s117
      %p124 = scmp.eq.s32.totalorder %s23, 1
      %p125 = por %p123, %p124
      %p126 = scmp.ne.s32.totalorder %s117, %s118
      %p127 = scmp.eq.s32.totalorder %s23, 0
      %p128 = por %p126, %p127
      %p129 = scmp.ne.s32.totalorder %s117, %s118
      %p130 = scmp.eq.s32.totalorder %s24, 1
      %p131 = por %p129, %p130
      %p133 = scmp.ne.s32.totalorder %s118, %s132
      %p134 = scmp.eq.s32.totalorder %s24, 0
      %p135 = por %p133, %p134
      %s136 = ssub.s32 %s18, %s25
      %p137 = scmp.eq.s32.totalorder %s136, 0
      %s139 = sadd.s32 %s138, 1
      %s140 = scalar_select %p137, %s138, %s139
      %p143 = pneg %p137
      %p144 = scmp.eq.s32.totalorder %s18, 1
      %p145 = por %p143, %p144
      %p146 = scmp.ne.s32.totalorder %s138, %s141
      %p147 = scmp.eq.s32.totalorder %s18, 0
      %p148 = por %p146, %p147
      %p149 = scmp.ne.s32.totalorder %s138, %s141
      %p150 = scmp.eq.s32.totalorder %s23, 1
      %p151 = por %p149, %p150
      %p152 = scmp.ne.s32.totalorder %s141, %s142
      %p153 = scmp.eq.s32.totalorder %s23, 0
      %p154 = por %p152, %p153
      %p155 = scmp.ne.s32.totalorder %s141, %s142
      %p156 = scmp.eq.s32.totalorder %s24, 1
      %p157 = por %p155, %p156
      %p159 = scmp.ne.s32.totalorder %s142, %s158
      %p160 = scmp.eq.s32.totalorder %s24, 0
      %p161 = por %p159, %p160
      %p162 = scmp.le.s32.totalorder 1, %s18
      %p163 = scmp.lt.s32.totalorder %s18, 3
      %p164 = pnand %p162, %p163
      %p165 = pneg %p164
      // Predicated region
      $region9: #{tpu_custom_call.1} parent=5 // pred_check
        _
      $region10: #{tpu_custom_call.1} parent=5 // pred_check_branch
        %167 = sbr.rel (%p164) target = $region12
      $region11: #{tpu_custom_call.1} parent=5 // pred_region
        %s168 = ssub.s32 %s18, 1
        // Predicated region
        $region13: #{tpu_custom_call.1} parent=11 // pred_check
          %p169 = pneg %p65
        $region14: #{tpu_custom_call.1} parent=11 // pred_check_branch
          %171 = sbr.rel (%p169) target = $region16
        $region15: #{tpu_custom_call.1} parent=11 // pred_region
          %s173 = ssub.s32 3072, 3072
          %174 = vsyncadd [#allocation6], %s173
          %s175 = sshll.u32 [#allocation5], 4
          %s176 = int_to_ptr.vmem [resolvable:$true] %s175
          %181 = dma.hbm_to_vmem [thread:$0]  %s1, 3072, %s176, [#allocation6], 192, 192, 12
        $region16: #{tpu_custom_call.1} parent=11 // pred_fallthru
          _
        // Predicated region
        $region17: #{tpu_custom_call.1} parent=11 // pred_check
          %p182 = pneg %p86
        $region18: #{tpu_custom_call.1} parent=11 // pred_check_branch
          %184 = sbr.rel (%p182) target = $region20
        $region19: #{tpu_custom_call.1} parent=11 // pred_region
          %s186 = ssub.s32 1024, 1024
          %187 = vsyncadd [#allocation6], %s186
          %s188 = sshll.u32 [#allocation7], 4
          %s189 = int_to_ptr.vmem [resolvable:$true] %s188
          %194 = dma.hbm_to_vmem [thread:$0]  %s2, 1024, %s189, [#allocation6], 64, 64, 4
        $region20: #{tpu_custom_call.1} parent=11 // pred_fallthru
          _
        // Predicated region
        $region21: #{tpu_custom_call.1} parent=11 // pred_check
          %p195 = pneg %p107
        $region22: #{tpu_custom_call.1} parent=11 // pred_check_branch
          %197 = sbr.rel (%p195) target = $region24
        $region23: #{tpu_custom_call.1} parent=11 // pred_region
          _
        $region24: #{tpu_custom_call.1} parent=11 // pred_fallthru
          _
        // Predicated region
        $region25: #{tpu_custom_call.1} parent=11 // pred_check
          %p198 = pneg %p128
        $region26: #{tpu_custom_call.1} parent=11 // pred_check_branch
          %200 = sbr.rel (%p198) target = $region28
        $region27: #{tpu_custom_call.1} parent=11 // pred_region
          _
        $region28: #{tpu_custom_call.1} parent=11 // pred_fallthru
          _
      $region12: #{tpu_custom_call.1} parent=5 // pred_fallthru
        _
      %p201 = scmp.lt.s32.totalorder %s18, 2
      // Predicated region
      $region29: #{tpu_custom_call.1} parent=5 // pred_check
        %p202 = pneg %p201
      $region30: #{tpu_custom_call.1} parent=5 // pred_check_branch
        %204 = sbr.rel (%p202) target = $region32
      $region31: #{tpu_custom_call.1} parent=5 // pred_region
        // Predicated region
        $region33: #{tpu_custom_call.1} parent=31 // pred_check
          %p205 = pneg %p38
        $region34: #{tpu_custom_call.1} parent=31 // pred_check_branch
          %207 = sbr.rel (%p205) target = $region36
        $region35: #{tpu_custom_call.1} parent=31 // pred_region
          %s208 = sand.u32 %s28, 1
          %s209 = scalar_lea.sflag [#allocation3], %s208
          %s210 = sand.u32 %s28, 1
          %s211 = smul.addr %s210, 16
          %s212 = scalar_lea.vmem [#allocation2], %s211
          %s214 = ssub.s32 256, 256
          %215 = vsyncadd %s209, %s214
          %s216 = smul.addr %s18, 2
          %s217 = smul.addr %s216, 128
          %s218 = scalar_lea.hbm %s0, %s217
          %s219 = sshll.u32 %s212, 4
          %s220 = int_to_ptr.vmem [resolvable:$true] %s219
          %225 = dma.hbm_to_vmem [thread:$0]  %s218, 256, %s220, %s209, 128, 128, 8
        $region36: #{tpu_custom_call.1} parent=31 // pred_fallthru
          _
      $region32: #{tpu_custom_call.1} parent=5 // pred_fallthru
        _
      %p226 = scmp.le.s32.totalorder 1, %s18
      %p227 = scmp.lt.s32.totalorder %s18, 3
      %p228 = pnand %p226, %p227
      %p229 = pneg %p228
      // Predicated region
      $region37: #{tpu_custom_call.1} parent=5 // pred_check
        _
      $region38: #{tpu_custom_call.1} parent=5 // pred_check_branch
        %231 = sbr.rel (%p228) target = $region40
      $region39: #{tpu_custom_call.1} parent=5 // pred_region
        %s232 = ssub.s32 %s18, 1
        %s233 = sand.u32 %s31, 1
        %s234 = scalar_lea.sflag [#allocation3], %s233
        %s235 = sand.u32 %s31, 1
        %s236 = smul.addr %s235, 16
        %s237 = scalar_lea.vmem [#allocation2], %s236
        // Predicated region
        $region41: #{tpu_custom_call.1} parent=39 // pred_check
          %p238 = pneg %p44
        $region42: #{tpu_custom_call.1} parent=39 // pred_check_branch
          %240 = sbr.rel (%p238) target = $region44
        $region43: #{tpu_custom_call.1} parent=39 // pred_region
          %241 = dma.done %s234, 256
        $region44: #{tpu_custom_call.1} parent=39 // pred_fallthru
          _
        // Predicated region
        $region45: #{tpu_custom_call.1} parent=39 // pred_check
          %p242 = pneg %p65
        $region46: #{tpu_custom_call.1} parent=39 // pred_check_branch
          %244 = sbr.rel (%p242) target = $region48
        $region47: #{tpu_custom_call.1} parent=39 // pred_region
          %245 = dma.done [#allocation6], 3072
        $region48: #{tpu_custom_call.1} parent=39 // pred_fallthru
          _
        // Predicated region
        $region49: #{tpu_custom_call.1} parent=39 // pred_check
          %p246 = pneg %p86
        $region50: #{tpu_custom_call.1} parent=39 // pred_check_branch
          %248 = sbr.rel (%p246) target = $region52
        $region51: #{tpu_custom_call.1} parent=39 // pred_region
          %249 = dma.done [#allocation6], 1024
        $region52: #{tpu_custom_call.1} parent=39 // pred_fallthru
          _
        %s250 = sand.u32 %s31, 1
        %s251 = scalar_lea.sflag [#allocation3], %s250
        %s252 = sand.u32 %s31, 1
        %s253 = smul.addr %s252, 16
        %s254 = scalar_lea.vmem [#allocation2], %s253
        %p255 = pneg %p44
        %p256 = pneg %p41
        %p257 = pneg %p65
        %p258 = pneg %p62
        %p259 = pneg %p86
        %p260 = pneg %p83
        %p261 = pneg %p107
        %p262 = pneg %p104
        %p263 = pneg %p128
        %p264 = pneg %p125
        %p265 = pneg %p154
        %p266 = pneg %p151
        %s267 = sand.u32 %s141, 1
        %s268 = scalar_lea.sflag [#allocation4], %s267
        %s269 = sand.u32 %s141, 1
        %s270 = smul.addr %s269, 8
        %s271 = scalar_lea.vmem [#allocation8], %s270
        %v273 = vld [vmem:[%s237] sm:$0xff]
        %v274 = vld [vmem:[%s237 + $0x8] sm:$0xff]
        %v275 = vpack.c.bf16 %v274, %v273
        %v276 = vld [vmem:[#allocation5] sm:$0xff]
        %v277 = vld [vmem:[#allocation5 + $0x8] sm:$0xf]
        %v278 = vld [vmem:[#allocation5 + $0xc] sm:$0xff]
        %v279 = vld [vmem:[#allocation5 + $0x14] sm:$0xf]
        %v280 = vld [vmem:[#allocation5 + $0x18] sm:$0xff]
        %v281 = vld [vmem:[#allocation5 + $0x20] sm:$0xf]
        %v282 = vld [vmem:[#allocation5 + $0x24] sm:$0xff]
        %v283 = vld [vmem:[#allocation5 + $0x2c] sm:$0xf]
        %v284 = vld [vmem:[#allocation5 + $0x30] sm:$0xff]
        %v285 = vld [vmem:[#allocation5 + $0x38] sm:$0xf]
        %v286 = vld [vmem:[#allocation5 + $0x3c] sm:$0xff]
        %v287 = vld [vmem:[#allocation5 + $0x44] sm:$0xf]
        %v288 = vld [vmem:[#allocation5 + $0x48] sm:$0xff]
        %v289 = vld [vmem:[#allocation5 + $0x50] sm:$0xf]
        %v290 = vld [vmem:[#allocation5 + $0x54] sm:$0xff]
        %v291 = vld [vmem:[#allocation5 + $0x5c] sm:$0xf]
        %v292 = vld [vmem:[#allocation5 + $0x60] sm:$0xff]
        %v293 = vld [vmem:[#allocation5 + $0x68] sm:$0xf]
        %v294 = vld [vmem:[#allocation5 + $0x6c] sm:$0xff]
        %v295 = vld [vmem:[#allocation5 + $0x74] sm:$0xf]
        %v296 = vld [vmem:[#allocation5 + $0x78] sm:$0xff]
        %v297 = vld [vmem:[#allocation5 + $0x80] sm:$0xf]
        %v298 = vld [vmem:[#allocation5 + $0x84] sm:$0xff]
        %v299 = vld [vmem:[#allocation5 + $0x8c] sm:$0xf]
        %v300 = vld [vmem:[#allocation5 + $0x90] sm:$0xff]
        %v301 = vld [vmem:[#allocation5 + $0x98] sm:$0xf]
        %v302 = vld [vmem:[#allocation5 + $0x9c] sm:$0xff]
        %v303 = vld [vmem:[#allocation5 + $0xa4] sm:$0xf]
        %v304 = vld [vmem:[#allocation5 + $0xa8] sm:$0xff]
        %v305 = vld [vmem:[#allocation5 + $0xb0] sm:$0xf]
        %v306 = vld [vmem:[#allocation5 + $0xb4] sm:$0xff]
        %v307 = vld [vmem:[#allocation5 + $0xbc] sm:$0xf]
        %v308 = vld [vmem:[%s3] sm:$0x7]
        %v310 = vlaneseq
        %v311 = vshrl.u32 %v310, 7
        %v312 = vsub.s32 0, %v311
        %v313 = vrot.slane %v308, %v312
        %v314 = vlaneseq
        %v315 = vshrl.u32 %v314, 7
        %v316 = vsub.s32 1, %v315
        %v317 = vrot.slane %v308, %v316
        %v318 = vlaneseq
        %v319 = vshrl.u32 %v318, 7
        %v320 = vsub.s32 2, %v319
        %v321 = vrot.slane %v308, %v320
        %v357 = vunpack.c.l.b16 %v276
        %v358 = vunpack.c.h.b16 %v276
        %v359 = vunpack.c.l.b16 %v277
        %v360 = vunpack.c.l.b16 %v278
        %v361 = vunpack.c.h.b16 %v278
        %v362 = vunpack.c.l.b16 %v279
        %v363 = vunpack.c.l.b16 %v280
        %v364 = vunpack.c.h.b16 %v280
        %v365 = vunpack.c.l.b16 %v281
        %v366 = vunpack.c.l.b16 %v282
        %v367 = vunpack.c.h.b16 %v282
        %v368 = vunpack.c.l.b16 %v283
        %v369 = vunpack.c.l.b16 %v284
        %v370 = vunpack.c.h.b16 %v284
        %v371 = vunpack.c.l.b16 %v285
        %v372 = vunpack.c.l.b16 %v286
        %v373 = vunpack.c.h.b16 %v286
        %v374 = vunpack.c.l.b16 %v287
        %v375 = vunpack.c.l.b16 %v288
        %v376 = vunpack.c.h.b16 %v288
        %v377 = vunpack.c.l.b16 %v289
        %v378 = vunpack.c.l.b16 %v290
        %v379 = vunpack.c.h.b16 %v290
        %v380 = vunpack.c.l.b16 %v291
        %v381 = vunpack.c.l.b16 %v292
        %v382 = vunpack.c.h.b16 %v292
        %v383 = vunpack.c.l.b16 %v293
        %v384 = vunpack.c.l.b16 %v294
        %v385 = vunpack.c.h.b16 %v294
        %v386 = vunpack.c.l.b16 %v295
        %v387 = vunpack.c.l.b16 %v296
        %v388 = vunpack.c.h.b16 %v296
        %v389 = vunpack.c.l.b16 %v297
        %v390 = vunpack.c.l.b16 %v298
        %v391 = vunpack.c.h.b16 %v298
        %v392 = vunpack.c.l.b16 %v299
        %v393 = vunpack.c.l.b16 %v300
        %v394 = vunpack.c.h.b16 %v300
        %v395 = vunpack.c.l.b16 %v301
        %v396 = vunpack.c.l.b16 %v302
        %v397 = vunpack.c.h.b16 %v302
        %v398 = vunpack.c.l.b16 %v303
        %v399 = vunpack.c.l.b16 %v304
        %v400 = vunpack.c.h.b16 %v304
        %v401 = vunpack.c.l.b16 %v305
        %v402 = vunpack.c.l.b16 %v306
        %v403 = vunpack.c.h.b16 %v306
        %v404 = vunpack.c.l.b16 %v307
        %v405 = vpack.c.b16 %v360, %v357
        %v406 = vpack.c.b16 %v361, %v358
        %v407 = vpack.c.b16 %v362, %v359
        %v408 = vpack.c.b16 %v366, %v363
        %v409 = vpack.c.b16 %v367, %v364
        %v410 = vpack.c.b16 %v368, %v365
        %v411 = vpack.c.b16 %v372, %v369
        %v412 = vpack.c.b16 %v373, %v370
        %v413 = vpack.c.b16 %v374, %v371
        %v414 = vpack.c.b16 %v378, %v375
        %v415 = vpack.c.b16 %v379, %v376
        %v416 = vpack.c.b16 %v380, %v377
        %v417 = vpack.c.b16 %v384, %v381
        %v418 = vpack.c.b16 %v385, %v382
        %v419 = vpack.c.b16 %v386, %v383
        %v420 = vpack.c.b16 %v390, %v387
        %v421 = vpack.c.b16 %v391, %v388
        %v422 = vpack.c.b16 %v392, %v389
        %v423 = vpack.c.b16 %v396, %v393
        %v424 = vpack.c.b16 %v397, %v394
        %v425 = vpack.c.b16 %v398, %v395
        %v426 = vpack.c.b16 %v402, %v399
        %v427 = vpack.c.b16 %v403, %v400
        %v428 = vpack.c.b16 %v404, %v401
        %453 = vmatprep.subr.bf16.mxu0 %v406
        %454 = vmatpush1.bf16.msra.mxu0 %v405
        %455 = vmatprep.subr.bf16.mxu0 %v409
        %456 = vmatpush1.bf16.msra.mxu0 %v408
        %457 = vmatprep.subr.bf16.mxu0 %v412
        %458 = vmatpush1.bf16.msra.mxu0 %v411
        %459 = vmatprep.subr.bf16.mxu0 %v415
        %460 = vmatpush1.bf16.msra.mxu0 %v414
        %461 = vmatprep.subr.bf16.mxu0 %v418
        %462 = vmatpush1.bf16.msra.mxu0 %v417
        %463 = vmatprep.subr.bf16.mxu0 %v421
        %464 = vmatpush1.bf16.msra.mxu0 %v420
        %465 = vmatprep.subr.bf16.mxu0 %v424
        %466 = vmatpush1.bf16.msra.mxu0 %v423
        %467 = vmatprep.subr.bf16.mxu0 %v427
        %468 = vmatpush1.bf16.msra.mxu0 %v426
        %469 = vmatprep.subr.bf16.mxu0 0
        %470 = vmatpush1.bf16.msra.mxu0 0
        %471 = vmatprep.subr.bf16.mxu0 0
        %472 = vmatpush1.bf16.msra.mxu0 0
        %473 = vmatprep.subr.bf16.mxu0 0
        %474 = vmatpush1.bf16.msra.mxu0 0
        %475 = vmatprep.subr.bf16.mxu0 0
        %476 = vmatpush1.bf16.msra.mxu0 0
        %477 = vmatprep.subr.bf16.mxu0 0
        %478 = vmatpush1.bf16.msra.mxu0 0
        %479 = vmatprep.subr.bf16.mxu0 0
        %480 = vmatpush1.bf16.msra.mxu0 0
        %481 = vmatprep.subr.bf16.mxu0 0
        %482 = vmatpush1.bf16.msra.mxu0 0
        %483 = vmatprep.subr.bf16.mxu0 0
        %484 = vmatpush1.bf16.msra.mxu0 0
        %485 = vmatprep.mubr.bf16.mxu0 0
        %486 = vmatmul.mubr.bf16.gmra.mrb[0].mxu0 %v275
        %v487 = vpop.f32.mrb[0].mxu0
        %v488 = vadd.f32 %v313, %v487
        %v489 = vpop.f32.mrb[0].mxu0
        %v490 = vadd.f32 %v317, %v489
        %v491 = vpop.f32.mrb[0].mxu0
        %v492 = vadd.f32 %v313, %v491
        %v493 = vpop.f32.mrb[0].mxu0
        %v494 = vadd.f32 %v317, %v493
        %495 = vdwg.mxu0
        %496 = vmatprep.subr.bf16.mxu0 0
        %497 = vmatpush1.bf16.msra.mxu0 %v407
        %498 = vmatprep.subr.bf16.mxu0 0
        %499 = vmatpush1.bf16.msra.mxu0 %v410
        %500 = vmatprep.subr.bf16.mxu0 0
        %501 = vmatpush1.bf16.msra.mxu0 %v413
        %502 = vmatprep.subr.bf16.mxu0 0
        %503 = vmatpush1.bf16.msra.mxu0 %v416
        %504 = vmatprep.subr.bf16.mxu0 0
        %505 = vmatpush1.bf16.msra.mxu0 %v419
        %506 = vmatprep.subr.bf16.mxu0 0
        %507 = vmatpush1.bf16.msra.mxu0 %v422
        %508 = vmatprep.subr.bf16.mxu0 0
        %509 = vmatpush1.bf16.msra.mxu0 %v425
        %510 = vmatprep.subr.bf16.mxu0 0
        %511 = vmatpush1.bf16.msra.mxu0 %v428
        %512 = vmatprep.subr.bf16.mxu0 0
        %513 = vmatpush1.bf16.msra.mxu0 0
        %514 = vmatprep.subr.bf16.mxu0 0
        %515 = vmatpush1.bf16.msra.mxu0 0
        %516 = vmatprep.subr.bf16.mxu0 0
        %517 = vmatpush1.bf16.msra.mxu0 0
        %518 = vmatprep.subr.bf16.mxu0 0
        %519 = vmatpush1.bf16.msra.mxu0 0
        %520 = vmatprep.subr.bf16.mxu0 0
        %521 = vmatpush1.bf16.msra.mxu0 0
        %522 = vmatprep.subr.bf16.mxu0 0
        %523 = vmatpush1.bf16.msra.mxu0 0
        %524 = vmatprep.subr.bf16.mxu0 0
        %525 = vmatpush1.bf16.msra.mxu0 0
        %526 = vmatprep.subr.bf16.mxu0 0
        %527 = vmatpush1.bf16.msra.mxu0 0
        %528 = vmatprep.mubr.bf16.mxu0 0
        %529 = vmatmul.mubr.bf16.gmra.mrb[0].mxu0 %v275
        %v530 = vpop.f32.mrb[0].mxu0
        %v531 = vadd.f32 %v321, %v530
        %v532 = vpop.f32.mrb[0].mxu0
        %v533 = vpop.f32.mrb[0].mxu0
        %v534 = vadd.f32 %v321, %v533
        %v535 = vpop.f32.mrb[0].mxu0
        %536 = vdwg.mxu0
        %v537 = vpack.c.bf16 %v492, %v488
        %v538 = vpack.c.bf16 %v494, %v490
        %v539 = vpack.c.bf16 %v534, %v531
        %540 = vmatprep.subr.bf16.mxu0 0
        %541 = vmatpush1.bf16.xpose.msra.mxu0 %v538
        %542 = vmatprep.subr.bf16.mxu0 0
        %543 = vmatpush1.bf16.xpose.msra.mxu0 0
        %544 = vmatprep.subr.bf16.mxu0 0
        %545 = vmatpush1.bf16.xpose.msra.mxu0 0
        %546 = vmatprep.subr.bf16.mxu0 0
        %547 = vmatpush1.bf16.xpose.msra.mxu0 0
        %548 = vmatprep.subr.bf16.mxu0 0
        %549 = vmatpush1.bf16.xpose.msra.mxu0 0
        %550 = vmatprep.subr.bf16.mxu0 0
        %551 = vmatpush1.bf16.xpose.msra.mxu0 0
        %552 = vmatprep.subr.bf16.mxu0 0
        %553 = vmatpush1.bf16.xpose.msra.mxu0 0
        %554 = vmatprep.subr.bf16.mxu0 0
        %555 = vmatpush1.bf16.xpose.msra.mxu0 0
        %556 = vmatprep.subr.bf16.mxu0 0
        %557 = vmatpush1.bf16.xpose.msra.mxu0 0
        %558 = vmatprep.subr.bf16.mxu0 0
        %559 = vmatpush1.bf16.xpose.msra.mxu0 0
        %560 = vmatprep.subr.bf16.mxu0 0
        %561 = vmatpush1.bf16.xpose.msra.mxu0 0
        %562 = vmatprep.subr.bf16.mxu0 0
        %563 = vmatpush1.bf16.xpose.msra.mxu0 0
        %564 = vmatprep.subr.bf16.mxu0 0
        %565 = vmatpush1.bf16.xpose.msra.mxu0 0
        %566 = vmatprep.subr.bf16.mxu0 0
        %567 = vmatpush1.bf16.xpose.msra.mxu0 0
        %568 = vmatprep.subr.bf16.mxu0 0
        %569 = vmatpush1.bf16.xpose.msra.mxu0 0
        %570 = vmatprep.subr.bf16.mxu0 0
        %571 = vmatpush1.bf16.xpose.msra.mxu0 0
        %572 = vmatprep.mubr.bf16.mxu0 0
        %573 = vmatmul.mubr.bf16.gmra.mrb[0].mxu0 %v537
        %v574 = vpop.f32.mrb[0].mxu0
        %v575 = vadd.f32 0.0, %v574
        %v576 = vpop.f32.mrb[0].mxu0
        %v577 = vpop.f32.mrb[0].mxu0
        %v578 = vadd.f32 0.0, %v577
        %v579 = vpop.f32.mrb[0].mxu0
        %580 = vdwg.mxu0
        %vm581 = vcmask 130048
        %v582 = vsel %vm581, %v575, -inf
        %583 = vmax.xlane.f32.xlu0 %v582
        %v584 = vpop.xlane.xlu0 %583
        %v585 = vsel %vm581, %v578, -inf
        %586 = vmax.xlane.f32.xlu0 %v585
        %v587 = vpop.xlane.xlu0 %586
        %v588 = vsub.f32 %v575, %v584
        %v589 = vsub.f32 %v578, %v587
        %v590 = vmul.f32 %v588, 1.442695
        %v591 = vpow.pop %v590
        %v592 = vmul.f32 %v589, 1.442695
        %v593 = vpow.pop %v592
        %v594 = vsel %vm581, %v591, 0.0
        %595 = vadd.xlane.f32.xlu0 %v594
        %v596 = vpop.xlane.xlu0 %595
        %v597 = vsel %vm581, %v593, 0.0
        %598 = vadd.xlane.f32.xlu0 %v597
        %v599 = vpop.xlane.xlu0 %598
        %v600 = vpack.c.bf16 %v593, %v591
        %v602 = vsel %vm581, %v600, 0
        %604 = vmatprep.subr.bf16.mxu0 0
        %605 = vmatpush1.bf16.msra.mxu0 %v539
        %606 = vmatprep.subr.bf16.mxu0 0
        %607 = vmatpush1.bf16.msra.mxu0 0
        %608 = vmatprep.subr.bf16.mxu0 0
        %609 = vmatpush1.bf16.msra.mxu0 0
        %610 = vmatprep.subr.bf16.mxu0 0
        %611 = vmatpush1.bf16.msra.mxu0 0
        %612 = vmatprep.subr.bf16.mxu0 0
        %613 = vmatpush1.bf16.msra.mxu0 0
        %614 = vmatprep.subr.bf16.mxu0 0
        %615 = vmatpush1.bf16.msra.mxu0 0
        %616 = vmatprep.subr.bf16.mxu0 0
        %617 = vmatpush1.bf16.msra.mxu0 0
        %618 = vmatprep.subr.bf16.mxu0 0
        %619 = vmatpush1.bf16.msra.mxu0 0
        %620 = vmatprep.subr.bf16.mxu0 0
        %621 = vmatpush1.bf16.msra.mxu0 0
        %622 = vmatprep.subr.bf16.mxu0 0
        %623 = vmatpush1.bf16.msra.mxu0 0
        %624 = vmatprep.subr.bf16.mxu0 0
        %625 = vmatpush1.bf16.msra.mxu0 0
        %626 = vmatprep.subr.bf16.mxu0 0
        %627 = vmatpush1.bf16.msra.mxu0 0
        %628 = vmatprep.subr.bf16.mxu0 0
        %629 = vmatpush1.bf16.msra.mxu0 0
        %630 = vmatprep.subr.bf16.mxu0 0
        %631 = vmatpush1.bf16.msra.mxu0 0
        %632 = vmatprep.subr.bf16.mxu0 0
        %633 = vmatpush1.bf16.msra.mxu0 0
        %634 = vmatprep.subr.bf16.mxu0 0
        %635 = vmatpush1.bf16.msra.mxu0 0
        %636 = vmatprep.mubr.bf16.mxu0 0
        %637 = vmatmul.mubr.bf16.gmra.mrb[0].mxu0 %v602
        %v638 = vpop.f32.mrb[0].mxu0
        %v639 = vadd.f32 0.0, %v638
        %v640 = vpop.f32.mrb[0].mxu0
        %v641 = vpop.f32.mrb[0].mxu0
        %v642 = vadd.f32 0.0, %v641
        %v643 = vpop.f32.mrb[0].mxu0
        %644 = vdwg.mxu0
        %v645 = vrcp.pop %v596
        %v646 = vrcp.pop %v599
        %v647 = vmul.f32 %v639, %v645
        %v648 = vmul.f32 %v642, %v646
        %v649 = vpack.c.bf16 %v648, %v647
        %v650 = vld [vmem:[#allocation7] sm:$0xf]
        %v651 = vld [vmem:[#allocation7 + $0x4] sm:$0xf]
        %v652 = vld [vmem:[#allocation7 + $0x8] sm:$0xf]
        %v653 = vld [vmem:[#allocation7 + $0xc] sm:$0xf]
        %v654 = vld [vmem:[#allocation7 + $0x10] sm:$0xf]
        %v655 = vld [vmem:[#allocation7 + $0x14] sm:$0xf]
        %v656 = vld [vmem:[#allocation7 + $0x18] sm:$0xf]
        %v657 = vld [vmem:[#allocation7 + $0x1c] sm:$0xf]
        %v658 = vld [vmem:[#allocation7 + $0x20] sm:$0xf]
        %v659 = vld [vmem:[#allocation7 + $0x24] sm:$0xf]
        %v660 = vld [vmem:[#allocation7 + $0x28] sm:$0xf]
        %v661 = vld [vmem:[#allocation7 + $0x2c] sm:$0xf]
        %v662 = vld [vmem:[#allocation7 + $0x30] sm:$0xf]
        %v663 = vld [vmem:[#allocation7 + $0x34] sm:$0xf]
        %v664 = vld [vmem:[#allocation7 + $0x38] sm:$0xf]
        %v665 = vld [vmem:[#allocation7 + $0x3c] sm:$0xf]
        %v666 = vld [vmem:[%s4] sm:$0x1]
        %v668 = vlaneseq
        %v669 = vshrl.u32 %v668, 7
        %v670 = vsub.s32 0, %v669
        %v671 = vrot.slane %v666, %v670
        %v689 = vunpack.c.l.b16 %v650
        %v690 = vunpack.c.l.b16 %v651
        %v691 = vunpack.c.l.b16 %v652
        %v692 = vunpack.c.l.b16 %v653
        %v693 = vunpack.c.l.b16 %v654
        %v694 = vunpack.c.l.b16 %v655
        %v695 = vunpack.c.l.b16 %v656
        %v696 = vunpack.c.l.b16 %v657
        %v697 = vunpack.c.l.b16 %v658
        %v698 = vunpack.c.l.b16 %v659
        %v699 = vunpack.c.l.b16 %v660
        %v700 = vunpack.c.l.b16 %v661
        %v701 = vunpack.c.l.b16 %v662
        %v702 = vunpack.c.l.b16 %v663
        %v703 = vunpack.c.l.b16 %v664
        %v704 = vunpack.c.l.b16 %v665
        %v705 = vpack.c.b16 %v690, %v689
        %v706 = vpack.c.b16 %v692, %v691
        %v707 = vpack.c.b16 %v694, %v693
        %v708 = vpack.c.b16 %v696, %v695
        %v709 = vpack.c.b16 %v698, %v697
        %v710 = vpack.c.b16 %v700, %v699
        %v711 = vpack.c.b16 %v702, %v701
        %v712 = vpack.c.b16 %v704, %v703
        %721 = vmatprep.subr.bf16.mxu0 0
        %722 = vmatpush1.bf16.msra.mxu0 %v705
        %723 = vmatprep.subr.bf16.mxu0 0
        %724 = vmatpush1.bf16.msra.mxu0 %v706
        %725 = vmatprep.subr.bf16.mxu0 0
        %726 = vmatpush1.bf16.msra.mxu0 %v707
        %727 = vmatprep.subr.bf16.mxu0 0
        %728 = vmatpush1.bf16.msra.mxu0 %v708
        %729 = vmatprep.subr.bf16.mxu0 0
        %730 = vmatpush1.bf16.msra.mxu0 %v709
        %731 = vmatprep.subr.bf16.mxu0 0
        %732 = vmatpush1.bf16.msra.mxu0 %v710
        %733 = vmatprep.subr.bf16.mxu0 0
        %734 = vmatpush1.bf16.msra.mxu0 %v711
        %735 = vmatprep.subr.bf16.mxu0 0
        %736 = vmatpush1.bf16.msra.mxu0 %v712
        %737 = vmatprep.subr.bf16.mxu0 0
        %738 = vmatpush1.bf16.msra.mxu0 0
        %739 = vmatprep.subr.bf16.mxu0 0
        %740 = vmatpush1.bf16.msra.mxu0 0
        %741 = vmatprep.subr.bf16.mxu0 0
        %742 = vmatpush1.bf16.msra.mxu0 0
        %743 = vmatprep.subr.bf16.mxu0 0
        %744 = vmatpush1.bf16.msra.mxu0 0
        %745 = vmatprep.subr.bf16.mxu0 0
        %746 = vmatpush1.bf16.msra.mxu0 0
        %747 = vmatprep.subr.bf16.mxu0 0
        %748 = vmatpush1.bf16.msra.mxu0 0
        %749 = vmatprep.subr.bf16.mxu0 0
        %750 = vmatpush1.bf16.msra.mxu0 0
        %751 = vmatprep.subr.bf16.mxu0 0
        %752 = vmatpush1.bf16.msra.mxu0 0
        %753 = vmatprep.mubr.bf16.mxu0 0
        %754 = vmatmul.mubr.bf16.gmra.mrb[0].mxu0 %v649
        %v755 = vpop.f32.mrb[0].mxu0
        %v756 = vadd.f32 %v671, %v755
        %v757 = vpop.f32.mrb[0].mxu0
        %v758 = vpop.f32.mrb[0].mxu0
        %v759 = vadd.f32 %v671, %v758
        %v760 = vpop.f32.mrb[0].mxu0
        %761 = vdwg.mxu0
        %v762 = vpack.c.bf16 %v759, %v756
        %v764 = vunpack.c.l.b16 %v762
        %v765 = vunpack.c.h.b16 %v762
        %v766 = vpack.c.b16 %v764, %v764
        %v767 = vpack.c.b16 %v765, %v765
        %770 = vst [vmem:[%s271] sm:$0xf] %v766
        %771 = vst [vmem:[%s271 + $0x4] sm:$0xf] %v767
        %s772 = sand.u32 %s141, 1
        %s773 = scalar_lea.sflag [#allocation4], %s772
        %s774 = sand.u32 %s141, 1
        %s775 = smul.addr %s774, 8
        %s776 = scalar_lea.vmem [#allocation8], %s775
        // Predicated region
        $region53: #{tpu_custom_call.1} parent=39 // pred_check
          %p777 = pneg %p151
        $region54: #{tpu_custom_call.1} parent=39 // pred_check_branch
          %779 = sbr.rel (%p777) target = $region56
        $region55: #{tpu_custom_call.1} parent=39 // pred_region
          %s781 = ssub.s32 128, 128
          %782 = vsyncadd %s773, %s781
          %s783 = smul.addr %s23, 2
          %s784 = smul.addr %s783, 64
          %s785 = scalar_lea.hbm %s5, %s784
          %s786 = sshll.u32 %s776, 4
          %s787 = int_to_ptr.vmem [resolvable:$true] %s786
          %792 = dma.vmem_to_hbm [thread:$0]  %s787, 128, %s785, %s773, 64, 64, 4
        $region56: #{tpu_custom_call.1} parent=39 // pred_fallthru
          _
      $region40: #{tpu_custom_call.1} parent=5 // pred_fallthru
        _
      %p793 = scmp.le.s32.totalorder 2, %s18
      // Predicated region
      $region57: #{tpu_custom_call.1} parent=5 // pred_check
        %p794 = pneg %p793
      $region58: #{tpu_custom_call.1} parent=5 // pred_check_branch
        %796 = sbr.rel (%p794) target = $region60
      $region59: #{tpu_custom_call.1} parent=5 // pred_region
        %s797 = ssub.s32 %s18, 2
        // Predicated region
        $region61: #{tpu_custom_call.1} parent=59 // pred_check
          %p798 = pneg %p157
        $region62: #{tpu_custom_call.1} parent=59 // pred_check_branch
          %800 = sbr.rel (%p798) target = $region64
        $region63: #{tpu_custom_call.1} parent=59 // pred_region
          %s801 = sand.u32 %s142, 1
          %s802 = scalar_lea.sflag [#allocation4], %s801
          %s803 = sand.u32 %s142, 1
          %s804 = smul.addr %s803, 8
          %s805 = scalar_lea.vmem [#allocation8], %s804
          %806 = dma.done %s802, 128
        $region64: #{tpu_custom_call.1} parent=59 // pred_fallthru
          _
      $region60: #{tpu_custom_call.1} parent=5 // pred_fallthru
        _
    $region6: #{tpu_custom_call.1} parent=1 // loop_footer
      %s22 = sadd.s32 1, %s18
    $region7: #{tpu_custom_call.1} parent=1 // loop_footer_branch
      %17 = sbr.rel target = $region3
    $region8: #{tpu_custom_call.1} parent=1 // loop_exit
      _
    %807 = vsyncpa [#allocation3], 1
    %s808 = scalar_lea.sflag [#allocation3], 1
    %809 = vsyncpa %s808, 1
    %810 = vsyncpa [#allocation6], 1
    %811 = vsyncpa [#allocation4], 1
    %s812 = scalar_lea.sflag [#allocation4], 1
    %813 = vsyncpa %s812, 1

</llo_original>
